<compile_context>
chip_gen: v6e
topology: v6e:2x2x1
jax: 0.10.0
libtpu: 0.0.40
codegen_flags: <defaults>
</compile_context>

<pallas_src>
import jax
import jax.numpy as jnp
from jax.experimental import pallas as pl
from jax.experimental.pallas import tpu as pltpu


# ----------------------------- helpers ---------------------------------------


def _round_up(x, m):
    return ((x + m - 1) // m) * m


def _vmem_limit_bytes():
    """Generation-aware VMEM ceiling: headroom on v7x (64 MiB physical),
    allow >64 MiB requests on v5e/v6e (128 MiB physical)."""
    cap = 64 << 20
    try:
        info = pltpu.get_tpu_info()
        cap = int(getattr(info, "vmem_capacity_bytes", cap))
    except Exception:
        pass
    return max(32 << 20, min(int(cap * 0.85), cap - (8 << 20)))


def _compiler_params():
    return pltpu.CompilerParams(
        dimension_semantics=("parallel", "parallel", "arbitrary"),
        vmem_limit_bytes=_vmem_limit_bytes())


def _pick_tm(m):
    """Pick tm from {256..8} minimizing M padding waste (ties -> largest tm)."""
    best_tm, best_pad = None, None
    for c in (256, 128, 64, 32, 16, 8):
        p = _round_up(m, c)
        if best_pad is None or p < best_pad:
            best_tm, best_pad = c, p
    return best_tm, best_pad


def _pick_divisor_tile(dim_pad, candidates):
    """Largest candidate (all multiples of 128) that divides the padded dim."""
    for c in candidates:
        if dim_pad % c == 0:
            return c
    return 128


# ----------------------------- kernels ---------------------------------------


def _lora_linear_kernel(x_ref, w_ref, b_ref, xa_ref, bm_ref, o_ref, acc_ref):
    """Fused LoRA linear over grid (M//tm, N//tn, K//tk), K last.

    x_ref  : (tm, tk)     activations tile (compute dtype)
    w_ref  : (tk, tn)     frozen base weight tile (torch W.T)
    b_ref  : (1,  tn)     bias tile (f32)
    xa_ref : (tm, r_pad)  HOISTED x @ A tile (computed once outside the kernel)
    bm_ref : (r_pad, tn)  lora_B tile (torch B.T, pre-scaled by alpha/r)
    o_ref  : (tm, tn)     output tile
    acc_ref: (tm, tn)     f32 scratch -- accumulates x @ W across K
    """
    k = pl.program_id(2)

    @pl.when(k == 0)
    def _init():
        acc_ref[...] = jnp.zeros_like(acc_ref)

    acc_ref[...] += jnp.dot(x_ref[...], w_ref[...],
                            preferred_element_type=jnp.float32)

    @pl.when(k == pl.num_programs(2) - 1)
    def _finalize():
        lora = jnp.dot(xa_ref[...], bm_ref[...],
                       preferred_element_type=jnp.float32)
        out = acc_ref[...] + lora + b_ref[...].astype(jnp.float32)
        o_ref[...] = out.astype(o_ref.dtype)


def _linear_bias_kernel(x_ref, w_ref, b_ref, o_ref, acc_ref):
    """Tiled y = x @ W' + b  (adapter already folded into W')."""
    k = pl.program_id(2)

    @pl.when(k == 0)
    def _init():
        acc_ref[...] = jnp.zeros_like(acc_ref)

    acc_ref[...] += jnp.dot(x_ref[...], w_ref[...],
                            preferred_element_type=jnp.float32)

    @pl.when(k == pl.num_programs(2) - 1)
    def _finalize():
        out = acc_ref[...] + b_ref[...].astype(jnp.float32)
        o_ref[...] = out.astype(o_ref.dtype)


# ----------------------------- model stand-in --------------------------------


class PetlModelPallas:
    """Minimal JAX stand-in for PetlModel('lora') wrapping one LoRA Linear.

    forward(x) == base_linear(x) + (alpha/r) * lora_B(lora_A(x))

    All weight padding / casting / adapter folding is cached at __init__ so the
    per-call hot path only pads/casts the activation and launches the kernel.
    """

    def __init__(self, key, hidden_in=32, hidden_out=32, r=4, lora_alpha=8,
                 dtype=jnp.float32, compute_dtype=jnp.bfloat16):
        k_w, k_b, k_a, k_bm = jax.random.split(key, 4)
        self.hidden_in = hidden_in
        self.hidden_out = hidden_out
        self.r = r
        self.lora_alpha = lora_alpha
        self.scaling = lora_alpha / r
        self.compute_dtype = compute_dtype

        # Deterministic synthetic parameters (torch layout, then transposed).
        w_torch = jax.random.normal(k_w, (hidden_out, hidden_in), dtype) * 0.05
        self.w = w_torch.T                                   # (K, N)
        self.b = jax.random.normal(k_b, (hidden_out,), dtype) * 0.1
        a_torch = jax.random.normal(k_a, (r, hidden_in), dtype) * 0.05
        self.lora_a = a_torch.T                              # (K, r)
        # NOTE: real LoRA inits lora_B to zeros; use nonzero values so the
        # adapter path is actually exercised (as after training / checkpoint).
        bm_torch = jax.random.normal(k_bm, (hidden_out, r), dtype) * 0.05
        self.lora_b = bm_torch.T                             # (r, N)

        self._prepare()

    # -- one-time weight preparation (cached padded / bf16 / folded tensors) --
    def _prepare(self):
        K, N, r = self.hidden_in, self.hidden_out, self.r
        cd = self.compute_dtype
        f32 = jnp.float32
        self.K_pad = _round_up(K, 128)
        self.N_pad = _round_up(N, 128)
        self.r_pad = _round_up(max(r, 8), 128)        # lane-dense rank

        w32 = self.w.astype(f32)
        a32 = self.lora_a.astype(f32)
        b32 = self.lora_b.astype(f32)

        pad_kn = ((0, self.K_pad - K), (0, self.N_pad - N))
        # Base weight (fused / training path).
        self.w_p = jnp.pad(w32, pad_kn).astype(cd)
        # Folded weight W' = W + (alpha/r) * A @ B (frozen-inference default).
        self.w_fold_p = jnp.pad(w32 + self.scaling * (a32 @ b32),
                                pad_kn).astype(cd)
        # Bias as lane-dense f32 row vector.
        self.b_p = jnp.pad(self.b.astype(f32), (0, self.N_pad - N)
                           ).reshape(1, self.N_pad)
        # lora_A kept unpadded for the per-call skinny x @ A matmul.
        self.lora_a_c = self.lora_a.astype(cd)                         # (K, r)
        # lora_B pre-scaled by alpha/r, rank padded to 128.
        self.bm_p = jnp.pad(self.scaling * b32,
                            ((0, self.r_pad - r), (0, self.N_pad - N))
                            ).astype(cd)
        # TODO(synk): per-generation weight quantization (fp8 on v7x, int8 on
        # v5e/v6e with per-channel dequant at finalize) for weight-stream-bound
        # decode shapes is not implemented here.

    # ----------------------------- forward -----------------------------------
    def __call__(self, x, *, fold_adapter=True, out_dtype=None,
                 tn=512, tk=1024):
        B, S, K = x.shape
        assert K == self.hidden_in
        N = self.hidden_out
        M = B * S
        cd = self.compute_dtype
        # Pass out_dtype=jnp.bfloat16 to halve output writeback traffic if the
        # consumer tolerates bf16.
        out_dtype = x.dtype if out_dtype is None else out_dtype

        # ---- tile selection ----
        tm, M_pad = _pick_tm(M)
        tn_eff = _pick_divisor_tile(
            self.N_pad, tuple(c for c in (512, 384, 256, 128) if c <= tn))
        tk_eff = _pick_divisor_tile(
            self.K_pad, tuple(c for c in (1024, 512, 256, 128) if c <= tk))
        gm = M_pad // tm
        # v7x megacore: with gm == 1 make sure >= 2 blocks exist on the N axis
        # so both TensorCores get work.
        if gm == 1 and self.N_pad // tn_eff < 2:
            for c in (256, 128):
                if c < tn_eff and self.N_pad % c == 0 and self.N_pad // c >= 2:
                    tn_eff = c
                    break
        gn = self.N_pad // tn_eff
        gk = self.K_pad // tk_eff
        grid = (gm, gn, gk)

        # ---- per-call activation prep (only thing done per call) ----
        x2d = x.reshape(M, K)
        x_p = jnp.pad(x2d, ((0, M_pad - M), (0, self.K_pad - K))).astype(cd)

        x_spec = pl.BlockSpec((tm, tk_eff), lambda i, j, k: (i, k))
        w_spec = pl.BlockSpec((tk_eff, tn_eff), lambda i, j, k: (k, j))
        b_spec = pl.BlockSpec((1, tn_eff), lambda i, j, k: (0, j))
        o_spec = pl.BlockSpec((tm, tn_eff), lambda i, j, k: (i, j))

        out_shape = jax.ShapeDtypeStruct((M_pad, self.N_pad), out_dtype)
        acc_scratch = pltpu.VMEM((tm, tn_eff), jnp.float32)
        csize = jnp.dtype(cd).itemsize
        osize = jnp.dtype(out_dtype).itemsize

        if fold_adapter:
            flops = 2 * M_pad * self.K_pad * self.N_pad
            bytes_accessed = (M_pad * self.K_pad * csize * gn
                              + self.K_pad * self.N_pad * csize * gm
                              + self.N_pad * 4 * gm
                              + M_pad * self.N_pad * osize)
            out2d = pl.pallas_call(
                _linear_bias_kernel,
                out_shape=out_shape,
                grid_spec=pltpu.PrefetchScalarGridSpec(
                    num_scalar_prefetch=0,
                    grid=grid,
                    in_specs=[x_spec, w_spec, b_spec],
                    out_specs=o_spec,
                    scratch_shapes=[acc_scratch]),
                compiler_params=_compiler_params(),
                cost_estimate=pl.CostEstimate(flops=flops, transcendentals=0,
                                              bytes_accessed=bytes_accessed),
            )(x_p, self.w_fold_p, self.b_p)
        else:
            # Hoisted adapter contraction: skinny (M, K, r) matmul runs ONCE
            # outside the kernel (XLA); the kernel only pays a single
            # (tm, r_pad, tn) matmul per output tile at finalize.
            xa = jnp.dot(x2d.astype(cd), self.lora_a_c,
                         preferred_element_type=jnp.float32)          # (M, r)
            xa_p = jnp.pad(xa, ((0, M_pad - M), (0, self.r_pad - self.r))
                           ).astype(cd)

            xa_spec = pl.BlockSpec((tm, self.r_pad), lambda i, j, k: (i, 0))
            bm_spec = pl.BlockSpec((self.r_pad, tn_eff), lambda i, j, k: (0, j))

            flops = (2 * M_pad * self.K_pad * self.N_pad
                     + 2 * M_pad * self.r_pad * self.N_pad)
            bytes_accessed = (M_pad * self.K_pad * csize * gn
                              + self.K_pad * self.N_pad * csize * gm
                              + M_pad * self.r_pad * csize * gn
                              + self.r_pad * self.N_pad * csize * gm
                              + self.N_pad * 4 * gm
                              + M_pad * self.N_pad * osize)
            out2d = pl.pallas_call(
                _lora_linear_kernel,
                out_shape=out_shape,
                grid_spec=pltpu.PrefetchScalarGridSpec(
                    num_scalar_prefetch=0,
                    grid=grid,
                    in_specs=[x_spec, w_spec, b_spec, xa_spec, bm_spec],
                    out_specs=o_spec,
                    scratch_shapes=[acc_scratch]),
                compiler_params=_compiler_params(),
                cost_estimate=pl.CostEstimate(flops=flops, transcendentals=0,
                                              bytes_accessed=bytes_accessed),
            )(x_p, self.w_p, self.b_p, xa_p, self.bm_p)

        return out2d[:M, :N].reshape(B, S, N)

    # ----------------------------- reference ---------------------------------
    def reference(self, x):
        """Pure f32 math matching the PyTorch module's forward."""
        f32 = jnp.float32
        xf = x.astype(f32)
        base = xf @ self.w.astype(f32) + self.b.astype(f32)
        lora = (xf @ self.lora_a.astype(f32)) @ self.lora_b.astype(f32)
        return (base + self.scaling * lora).astype(x.dtype)


if __name__ == "__main__":
    key = jax.random.PRNGKey(0)
    k_model, k_x, k_model2, k_x2 = jax.random.split(key, 4)

    # Small shapes consistent with the module: (batch, seq, hidden) = (2, 8, 32).
    batch, seq, hidden = 2, 8, 32
    model = PetlModelPallas(k_model, hidden_in=hidden, hidden_out=hidden,
                            r=4, lora_alpha=8)
    x = jax.random.normal(k_x, (batch, seq, hidden), jnp.float32)

    out_folded = jax.block_until_ready(model(x))                        # default: merged W'
    out_fused = jax.block_until_ready(model(x, fold_adapter=False))     # hoisted-xa adapter path
    ref = model.reference(x)
    assert out_folded.shape == (batch, seq, hidden)
    assert jnp.allclose(out_folded, ref, atol=2e-2, rtol=2e-2), "folded mismatch"
    assert jnp.allclose(out_fused, ref, atol=2e-2, rtol=2e-2), "fused mismatch"

    # Second check exercising the real tiled path (multi-tile N and multi-step
    # K accumulation with pl.when init/finalize, plus the megacore N split).
    model2 = PetlModelPallas(k_model2, hidden_in=256, hidden_out=384,
                             r=4, lora_alpha=8)
    x2 = jax.random.normal(k_x2, (2, 16, 256), jnp.float32)
    out2_folded = jax.block_until_ready(model2(x2))                      # grid (1, 3, 1)
    out2_fused = jax.block_until_ready(
        model2(x2, fold_adapter=False, tn=128, tk=128))                  # grid (1, 3, 2)
    ref2 = model2.reference(x2)
    assert out2_folded.shape == (2, 16, 384)
    assert jnp.allclose(out2_folded, ref2, atol=2e-2, rtol=2e-2), "tiled folded mismatch"
    assert jnp.allclose(out2_fused, ref2, atol=2e-2, rtol=2e-2), "tiled fused mismatch"

    # TODO(synk): PetlModel's non-forward machinery (save/load adapters,
    # set_adapter, disable_adapter context, gradient-checkpointing prep) is
    # host-side bookkeeping with no kernel equivalent and is not modeled.
    print("KERNEL_OK")
</pallas_src>

<mosaic_0001>
module attributes {stable_mosaic.version = 11 : i64} {
  func.func @_linear_bias_kernel(%arg0: i32, %arg1: i32, %arg2: i32, %arg3: memref<16x128xbf16, #tpu.memory_space<vmem>>, %arg4: memref<128x128xbf16, #tpu.memory_space<vmem>>, %arg5: memref<1x128xf32, #tpu.memory_space<vmem>>, %arg6: memref<16x128xf32, #tpu.memory_space<vmem>>, %arg7: memref<16x128xf32, #tpu.memory_space<vmem>>) attributes {dimension_semantics = [#tpu.dimension_semantics<parallel>, #tpu.dimension_semantics<parallel>, #tpu.dimension_semantics<arbitrary>], iteration_bounds = array<i64: 1, 1, 1>, scalar_prefetch = 0 : i64, scratch_operands = 1 : i64, tpu.core_type = #tpu.core_type<tc>, window_params = [{transform_indices = @transform_0, window_bounds = array<i64: 16, 128>}, {transform_indices = @transform_1, window_bounds = array<i64: 128, 128>}, {transform_indices = @transform_2, window_bounds = array<i64: 1, 128>}, {transform_indices = @transform_3, window_bounds = array<i64: 16, 128>}]} {
    %c0_i32 = arith.constant 0 : i32
    %0 = arith.cmpi eq, %arg2, %c0_i32 : i32
    %1 = arith.extui %0 : i1 to i32
    %c0_i32_0 = arith.constant 0 : i32
    %2 = arith.cmpi ne, %1, %c0_i32_0 : i32
    scf.if %2 {
      %cst_10 = arith.constant 0.000000e+00 : f32
      %12 = vector.broadcast %cst_10 : f32 to vector<16x128xf32>
      %c0_11 = arith.constant 0 : index
      %c0_12 = arith.constant 0 : index
      %13 = vector.load %arg7[%c0_11, %c0_12] : memref<16x128xf32, #tpu.memory_space<vmem>>, vector<16x128xf32>
      tpu.vector_store %arg7[%c0_11, %c0_12], %12 {strides = array<i32>} : memref<16x128xf32, #tpu.memory_space<vmem>>, vector<16x128xf32>,
    } else {
    }
    %c0 = arith.constant 0 : index
    %c0_1 = arith.constant 0 : index
    %3 = vector.load %arg7[%c0, %c0_1] : memref<16x128xf32, #tpu.memory_space<vmem>>, vector<16x128xf32>
    %c0_2 = arith.constant 0 : index
    %c0_3 = arith.constant 0 : index
    %4 = vector.load %arg3[%c0_2, %c0_3] : memref<16x128xbf16, #tpu.memory_space<vmem>>, vector<16x128xbf16>
    %c0_4 = arith.constant 0 : index
    %c0_5 = arith.constant 0 : index
    %5 = vector.load %arg4[%c0_4, %c0_5] : memref<128x128xbf16, #tpu.memory_space<vmem>>, vector<128x128xbf16>
    %cst = arith.constant dense<0.000000e+00> : vector<16x128xf32>
    %6 = tpu.matmul %4, %5, %cst {dimension_numbers = #tpu.dot_dimension_numbers<[1], [0], [0], [1], [0, 0, 1, 1], [], []>} : vector<16x128xbf16>, vector<128x128xbf16>, vector<16x128xf32> -> vector<16x128xf32>
    %7 = arith.addf %3, %6 : vector<16x128xf32>
    %c0_6 = arith.constant 0 : index
    %c0_7 = arith.constant 0 : index
    %8 = vector.load %arg7[%c0_6, %c0_7] : memref<16x128xf32, #tpu.memory_space<vmem>>, vector<16x128xf32>
    tpu.vector_store %arg7[%c0_6, %c0_7], %7 {strides = array<i32>} : memref<16x128xf32, #tpu.memory_space<vmem>>, vector<16x128xf32>,
    %c0_i32_8 = arith.constant 0 : i32
    %9 = arith.cmpi eq, %arg2, %c0_i32_8 : i32
    %10 = arith.extui %9 : i1 to i32
    %c0_i32_9 = arith.constant 0 : i32
    %11 = arith.cmpi ne, %10, %c0_i32_9 : i32
    scf.if %11 {
      %c0_10 = arith.constant 0 : index
      %c0_11 = arith.constant 0 : index
      %12 = vector.load %arg7[%c0_10, %c0_11] : memref<16x128xf32, #tpu.memory_space<vmem>>, vector<16x128xf32>
      %c0_12 = arith.constant 0 : index
      %c0_13 = arith.constant 0 : index
      %13 = vector.load %arg5[%c0_12, %c0_13] : memref<1x128xf32, #tpu.memory_space<vmem>>, vector<1x128xf32>
      %14 = vector.broadcast %13 : vector<1x128xf32> to vector<16x128xf32>
      %15 = arith.addf %12, %14 : vector<16x128xf32>
      %c0_14 = arith.constant 0 : index
      %c0_15 = arith.constant 0 : index
      %16 = vector.load %arg6[%c0_14, %c0_15] : memref<16x128xf32, #tpu.memory_space<vmem>>, vector<16x128xf32>
      tpu.vector_store %arg6[%c0_14, %c0_15], %15 {strides = array<i32>} : memref<16x128xf32, #tpu.memory_space<vmem>>, vector<16x128xf32>,
    } else {
    }
    return
  }
  func.func @transform_0(%arg0: i32, %arg1: i32, %arg2: i32) -> (i32, i32) {
    %c0_i32 = arith.constant 0 : i32
    return %arg0, %arg2 : i32, i32
  }
  func.func @transform_1(%arg0: i32, %arg1: i32, %arg2: i32) -> (i32, i32) {
    %c0_i32 = arith.constant 0 : i32
    return %arg2, %arg1 : i32, i32
  }
  func.func @transform_2(%arg0: i32, %arg1: i32, %arg2: i32) -> (i32, i32) {
    %c0_i32 = arith.constant 0 : i32
    %c0_i32_0 = arith.constant 0 : i32
    return %c0_i32, %arg1 : i32, i32
  }
  func.func @transform_3(%arg0: i32, %arg1: i32, %arg2: i32) -> (i32, i32) {
    %c0_i32 = arith.constant 0 : i32
    return %arg0, %arg1 : i32, i32
  }
}

</mosaic_0001>

<llo_original>
// kernel: tpu_custom_call.1
$region0: #{tpu_custom_call.1}
  #allocation0 [shape = 'u32[]', space=smem, size = 0x4, offset = 0x4, fixed_abs, tag = 'smem constant byte address 0x4 - core index']
  #allocation1 [shape = 'u32[144,128]{1,0:T(1,128)}', space=vmem, size = 0x12000, scoped, tag = 'internal scratch']
  #allocation2 [shape = 'f32[16,128]{1,0:T(8,128)}', space=vmem, size = 0x2000, scoped, tag = 'scratch operand']
  %s0 = inlined_call_operand.hbm [shape: bf16[16,128], index: 0, kind: input, shape index: {}]
  %s1 = inlined_call_operand.hbm [shape: bf16[128,128], index: 1, kind: input, shape index: {}]
  %s2 = inlined_call_operand.vmem [shape: f32[1,128], index: 2, kind: input, shape index: {}]
  %s3 = inlined_call_operand.hbm [shape: f32[16,128], index: 3, kind: output, shape index: {}]
  %s4 = sld [smem:[#allocation0]]
  $region38: #{tpu_custom_call.1} parent=0
    _
  %s6 = ssub.s32 1, %s4
  %s7 = scalar_select 0, %s6, %s4
  $region1: #{tpu_custom_call.1} parent=0
    #allocation3 [shape = 'u8[4096]{0}', space=vmem, size = 0x1000, scoped, tag = 'input window, operand 0, single buffered']
    #allocation4 [shape = 's32[1]{0}', space=sflag, size = 0x4, scoped, tag = 'scoped memory for tpu_custom_call.1']
    #allocation5 [shape = 's32[1]{0}', space=sflag, size = 0x4, scoped, tag = 'scoped memory for tpu_custom_call.1']
    #allocation6 [shape = 'u8[32768]{0}', space=vmem, size = 0x8000, scoped, tag = 'input window, operand 1, single buffered']
    #allocation7 [shape = 's32[1]{0}', space=sflag, size = 0x4, scoped, tag = 'scoped memory for tpu_custom_call.1']
    #allocation8 [shape = 'u8[8192]{0}', space=vmem, size = 0x2000, scoped, tag = 'output window, operand 0, single buffered']
    %8 = vsyncpa [#allocation4], 0
    %9 = vsyncpa [#allocation7], 0
    %10 = vsyncpa [#allocation5], 0
    // Predicated region
    $region2: #{tpu_custom_call.1} parent=1 // pred_check
      _
    $region3: #{tpu_custom_call.1} parent=1 // pred_check_branch
      %12 = sbr.rel (0) target = $region5
    $region4: #{tpu_custom_call.1} parent=1 // pred_region
      %s14 = ssub.s32 128, 128
      %15 = vsyncadd [#allocation4], %s14
      %s16 = sshll.u32 [#allocation3], 4
      %s17 = int_to_ptr.vmem [resolvable:$true] %s16
      %22 = dma.hbm_to_vmem [thread:$0]  %s0, 128, %s17, [#allocation4], 64, 64, 4
    $region5: #{tpu_custom_call.1} parent=1 // pred_fallthru
      _
    // Predicated region
    $region6: #{tpu_custom_call.1} parent=1 // pred_check
      _
    $region7: #{tpu_custom_call.1} parent=1 // pred_check_branch
      %24 = sbr.rel (0) target = $region9
    $region8: #{tpu_custom_call.1} parent=1 // pred_region
      %s26 = ssub.s32 1024, 1024
      %27 = vsyncadd [#allocation7], %s26
      %s28 = sshll.u32 [#allocation6], 4
      %s29 = int_to_ptr.vmem [resolvable:$true] %s28
      %34 = dma.hbm_to_vmem [thread:$0]  %s1, 1024, %s29, [#allocation7], 64, 64, 4
    $region9: #{tpu_custom_call.1} parent=1 // pred_fallthru
      _
    // Predicated region
    $region10: #{tpu_custom_call.1} parent=1 // pred_check
      _
    $region11: #{tpu_custom_call.1} parent=1 // pred_check_branch
      %36 = sbr.rel (0) target = $region13
    $region12: #{tpu_custom_call.1} parent=1 // pred_region
      _
    $region13: #{tpu_custom_call.1} parent=1 // pred_fallthru
      _
    // Predicated region
    $region14: #{tpu_custom_call.1} parent=1 // pred_check
      _
    $region15: #{tpu_custom_call.1} parent=1 // pred_check_branch
      %38 = sbr.rel (0) target = $region17
    $region16: #{tpu_custom_call.1} parent=1 // pred_region
      %39 = dma.done [#allocation4], 128
    $region17: #{tpu_custom_call.1} parent=1 // pred_fallthru
      _
    // Predicated region
    $region18: #{tpu_custom_call.1} parent=1 // pred_check
      _
    $region19: #{tpu_custom_call.1} parent=1 // pred_check_branch
      %41 = sbr.rel (0) target = $region21
    $region20: #{tpu_custom_call.1} parent=1 // pred_region
      %42 = dma.done [#allocation7], 1024
    $region21: #{tpu_custom_call.1} parent=1 // pred_fallthru
      _
    %p44 = scmp.eq.s32.totalorder 0, 0
    // Predicated region
    $region22: #{tpu_custom_call.1} parent=1 // pred_check
      %p45 = pneg %p44
    $region23: #{tpu_custom_call.1} parent=1 // pred_check_branch
      %47 = sbr.rel (%p45) target = $region25
    $region24: #{tpu_custom_call.1} parent=1 // pred_region
      %48 = vst [vmem:[#allocation2] sm:$0xff] 0.0
      %49 = vst [vmem:[#allocation2 + $0x8] sm:$0xff] 0.0
    $region25: #{tpu_custom_call.1} parent=1 // pred_fallthru
      _
    %v50 = vld [vmem:[#allocation2] sm:$0xff]
    %v51 = vld [vmem:[#allocation2 + $0x8] sm:$0xff]
    %v52 = vld [vmem:[#allocation3] sm:$0xf]
    %v53 = vld [vmem:[#allocation3 + $0x4] sm:$0xf]
    %v54 = vld [vmem:[#allocation6] sm:$0xf]
    %v55 = vld [vmem:[#allocation6 + $0x4] sm:$0xf]
    %v56 = vld [vmem:[#allocation6 + $0x8] sm:$0xf]
    %v57 = vld [vmem:[#allocation6 + $0xc] sm:$0xf]
    %v58 = vld [vmem:[#allocation6 + $0x10] sm:$0xf]
    %v59 = vld [vmem:[#allocation6 + $0x14] sm:$0xf]
    %v60 = vld [vmem:[#allocation6 + $0x18] sm:$0xf]
    %v61 = vld [vmem:[#allocation6 + $0x1c] sm:$0xf]
    %v62 = vld [vmem:[#allocation6 + $0x20] sm:$0xf]
    %v63 = vld [vmem:[#allocation6 + $0x24] sm:$0xf]
    %v64 = vld [vmem:[#allocation6 + $0x28] sm:$0xf]
    %v65 = vld [vmem:[#allocation6 + $0x2c] sm:$0xf]
    %v66 = vld [vmem:[#allocation6 + $0x30] sm:$0xf]
    %v67 = vld [vmem:[#allocation6 + $0x34] sm:$0xf]
    %v68 = vld [vmem:[#allocation6 + $0x38] sm:$0xf]
    %v69 = vld [vmem:[#allocation6 + $0x3c] sm:$0xf]
    %v72 = vunpack.c.l.b16 %v52
    %v73 = vunpack.c.l.b16 %v53
    %v74 = vpack.c.b16 %v73, %v72
    %v92 = vunpack.c.l.b16 %v54
    %v93 = vunpack.c.l.b16 %v55
    %v94 = vunpack.c.l.b16 %v56
    %v95 = vunpack.c.l.b16 %v57
    %v96 = vunpack.c.l.b16 %v58
    %v97 = vunpack.c.l.b16 %v59
    %v98 = vunpack.c.l.b16 %v60
    %v99 = vunpack.c.l.b16 %v61
    %v100 = vunpack.c.l.b16 %v62
    %v101 = vunpack.c.l.b16 %v63
    %v102 = vunpack.c.l.b16 %v64
    %v103 = vunpack.c.l.b16 %v65
    %v104 = vunpack.c.l.b16 %v66
    %v105 = vunpack.c.l.b16 %v67
    %v106 = vunpack.c.l.b16 %v68
    %v107 = vunpack.c.l.b16 %v69
    %v108 = vpack.c.b16 %v93, %v92
    %v109 = vpack.c.b16 %v95, %v94
    %v110 = vpack.c.b16 %v97, %v96
    %v111 = vpack.c.b16 %v99, %v98
    %v112 = vpack.c.b16 %v101, %v100
    %v113 = vpack.c.b16 %v103, %v102
    %v114 = vpack.c.b16 %v105, %v104
    %v115 = vpack.c.b16 %v107, %v106
    %124 = vmatprep.subr.bf16.mxu0 0
    %125 = vmatpush1.bf16.msra.mxu0 %v115
    %126 = vmatprep.subr.bf16.mxu0 0
    %127 = vmatpush1.bf16.msra.mxu0 %v114
    %128 = vmatprep.subr.bf16.mxu0 0
    %129 = vmatpush1.bf16.msra.mxu0 %v113
    %130 = vmatprep.subr.bf16.mxu0 0
    %131 = vmatpush1.bf16.msra.mxu0 %v112
    %132 = vmatprep.subr.bf16.mxu0 0
    %133 = vmatpush1.bf16.msra.mxu0 %v111
    %134 = vmatprep.subr.bf16.mxu0 0
    %135 = vmatpush1.bf16.msra.mxu0 %v110
    %136 = vmatprep.subr.bf16.mxu0 0
    %137 = vmatpush1.bf16.msra.mxu0 %v109
    %138 = vmatprep.subr.bf16.mxu0 0
    %139 = vmatpush1.bf16.msra.mxu0 %v108
    %140 = vmatprep.subr.bf16.mxu0 0
    %141 = vmatpush2.bf16.msra.mxu0 0
    %142 = vmatprep.subr.bf16.mxu0 0
    %143 = vmatpush2.bf16.msra.mxu0 0
    %144 = vmatprep.subr.bf16.mxu0 0
    %145 = vmatpush2.bf16.msra.mxu0 0
    %146 = vmatprep.subr.bf16.mxu0 0
    %147 = vmatpush2.bf16.msra.mxu0 0
    %148 = vmatprep.subr.bf16.mxu0 0
    %149 = vmatpush2.bf16.msra.mxu0 0
    %150 = vmatprep.subr.bf16.mxu0 0
    %151 = vmatpush2.bf16.msra.mxu0 0
    %152 = vmatprep.subr.bf16.mxu0 0
    %153 = vmatpush2.bf16.msra.mxu0 0
    %154 = vmatprep.subr.bf16.mxu0 0
    %155 = vmatpush2.bf16.msra.mxu0 0
    %156 = vmatprep.mubr.bf16.mxu0 0
    %157 = vmatmul.mubr.bf16.gmra.mxu0 %v74
    %v158 = vpop.f32.mrf.mxu0
    %v159 = vadd.f32 0.0, %v158
    %v160 = vpop.f32.mrf.mxu0
    %v161 = vpop.f32.mrf.mxu0
    %v162 = vadd.f32 0.0, %v161
    %v163 = vpop.f32.mrf.mxu0
    %164 = vdwg.mxu0
    %v165 = vadd.f32 %v50, %v159
    %v166 = vadd.f32 %v51, %v162
    %167 = vst [vmem:[#allocation2] sm:$0xff] %v165
    %168 = vst [vmem:[#allocation2 + $0x8] sm:$0xff] %v166
    // Predicated region
    $region26: #{tpu_custom_call.1} parent=1 // pred_check
      %p169 = pneg %p44
    $region27: #{tpu_custom_call.1} parent=1 // pred_check_branch
      %171 = sbr.rel (%p169) target = $region29
    $region28: #{tpu_custom_call.1} parent=1 // pred_region
      %v172 = vld [vmem:[#allocation2] sm:$0xff]
      %v173 = vld [vmem:[#allocation2 + $0x8] sm:$0xff]
      %v174 = vld [vmem:[%s2] sm:$0x1]
      %v176 = vlaneseq
      %v177 = vshrl.u32 %v176, 7
      %v178 = vsub.s32 0, %v177
      %v179 = vrot.slane %v174, %v178
      %v181 = vadd.f32 %v172, %v179
      %v182 = vadd.f32 %v173, %v179
      %183 = vst [vmem:[#allocation8] sm:$0xff] %v181
      %184 = vst [vmem:[#allocation8 + $0x8] sm:$0xff] %v182
    $region29: #{tpu_custom_call.1} parent=1 // pred_fallthru
      _
    // Predicated region
    $region30: #{tpu_custom_call.1} parent=1 // pred_check
      _
    $region31: #{tpu_custom_call.1} parent=1 // pred_check_branch
      %186 = sbr.rel (0) target = $region33
    $region32: #{tpu_custom_call.1} parent=1 // pred_region
      %s188 = ssub.s32 256, 256
      %189 = vsyncadd [#allocation5], %s188
      %s190 = sshll.u32 [#allocation8], 4
      %s191 = int_to_ptr.vmem [resolvable:$true] %s190
      %196 = dma.vmem_to_hbm [thread:$0]  %s191, 256, %s3, [#allocation5], 128, 128, 8
    $region33: #{tpu_custom_call.1} parent=1 // pred_fallthru
      _
    // Predicated region
    $region34: #{tpu_custom_call.1} parent=1 // pred_check
      _
    $region35: #{tpu_custom_call.1} parent=1 // pred_check_branch
      %198 = sbr.rel (0) target = $region37
    $region36: #{tpu_custom_call.1} parent=1 // pred_region
      %199 = dma.done [#allocation5], 256
    $region37: #{tpu_custom_call.1} parent=1 // pred_fallthru
      _
    %200 = vsyncpa [#allocation4], 1
    %201 = vsyncpa [#allocation7], 1
    %202 = vsyncpa [#allocation5], 1

</llo_original>
